<compile_context>
chip_gen: v7x
topology: tpu7x:2x2x1
jax: 0.10.0
libtpu: 0.0.40
codegen_flags: <defaults>
</compile_context>

<pallas_src>
import numpy as np
import jax
import jax.numpy as jnp
from jax.experimental import pallas as pl
from jax.experimental.pallas import tpu as pltpu

LANES = 128
SUBLANES = 8
N_STATS = 10
# stat lane indices inside the per-block output row
(S_SUM_P, S_SUM_T, S_SUM_PP, S_SUM_TT, S_SUM_PT,
 S_SSE, S_MIN_P, S_MIN_T, S_MAX_P, S_MAX_T) = range(N_STATS)


def _make_stats_kernel(n_valid, block_rows):
    """Kernel: one (block_rows, 128) tile of pred/targ -> one (1, 8, 128) stats tile."""

    def kernel(p_ref, t_ref, out_ref):
        i = pl.program_id(0)
        p = p_ref[...]
        t = t_ref[...]

        # in-kernel validity mask for the zero-padded tail (no extra mask input)
        row = jax.lax.broadcasted_iota(jnp.int32, (block_rows, LANES), 0)
        lane = jax.lax.broadcasted_iota(jnp.int32, (block_rows, LANES), 1)
        flat = (row + i * block_rows) * LANES + lane
        valid = flat < n_valid

        pz = jnp.where(valid, p, 0.0)
        tz = jnp.where(valid, t, 0.0)
        d = pz - tz

        stats_vals = [
            jnp.sum(pz),                                   # S_SUM_P
            jnp.sum(tz),                                   # S_SUM_T
            jnp.sum(pz * pz),                              # S_SUM_PP
            jnp.sum(tz * tz),                              # S_SUM_TT
            jnp.sum(pz * tz),                              # S_SUM_PT
            jnp.sum(d * d),                                # S_SSE  (ValueL2)
            jnp.min(jnp.where(valid, p, jnp.inf)),         # S_MIN_P
            jnp.min(jnp.where(valid, t, jnp.inf)),         # S_MIN_T
            jnp.max(jnp.where(valid, p, -jnp.inf)),        # S_MAX_P
            jnp.max(jnp.where(valid, t, -jnp.inf)),        # S_MAX_T
        ]

        # pack the scalars into a lane-dense (1, 8, 128) tile (unmasked store)
        out_lane = jax.lax.broadcasted_iota(jnp.int32, (1, SUBLANES, LANES), 2)
        stats = jnp.zeros((1, SUBLANES, LANES), jnp.float32)
        for idx, val in enumerate(stats_vals):
            stats = jnp.where(out_lane == idx, val, stats)
        out_ref[...] = stats

    return kernel


def _value_stats(pred, targ):
    """One fused Pallas pass -> (num_blocks, 8, 128) partial statistics."""
    n = pred.size
    p = pred.reshape(-1).astype(jnp.float32)
    t = targ.reshape(-1).astype(jnp.float32)

    rows = pl.cdiv(n, LANES)
    # Batch as many rows per grid step as reasonable (amortize the ~0.35us/step
    # overhead). 512 rows * 128 lanes * 4 B = 256 KiB per input block: far under
    # every generation's scoped VMEM budget even double-buffered (v5e 16 MiB).
    block_rows = SUBLANES * max(1, min(pl.cdiv(rows, SUBLANES), 64))
    num_blocks = pl.cdiv(rows, block_rows)
    rows_padded = num_blocks * block_rows
    pad = rows_padded * LANES - n

    p2 = jnp.pad(p, (0, pad)).reshape(rows_padded, LANES)
    t2 = jnp.pad(t, (0, pad)).reshape(rows_padded, LANES)

    return pl.pallas_call(
        _make_stats_kernel(n, block_rows),
        out_shape=jax.ShapeDtypeStruct((num_blocks, SUBLANES, LANES), jnp.float32),
        grid_spec=pltpu.PrefetchScalarGridSpec(
            num_scalar_prefetch=0,
            grid=(num_blocks,),
            in_specs=[
                pl.BlockSpec((block_rows, LANES), lambda i: (i, 0)),
                pl.BlockSpec((block_rows, LANES), lambda i: (i, 0)),
            ],
            out_specs=pl.BlockSpec((1, SUBLANES, LANES), lambda i: (i, 0, 0)),
        ),
        compiler_params=pltpu.CompilerParams(
            # per-step partial outputs -> no resident accumulator -> safe to
            # run the grid axis in parallel (2 TCs on v7x; no-op on v5e/v6e)
            dimension_semantics=("parallel",),
            vmem_limit_bytes=16 * 1024 * 1024,
        ),
    )(p2, t2)


def value_loss(pred, targ):
    """Matches ValueLoss.forward: returns (loss, info)."""
    # TODO(synk): ValueLoss._loss is abstract in the base class; this implements
    # the ValueL2 variant (elementwise squared error). For ValueL1 replace the
    # S_SSE statistic with sum(|p - t|) in the kernel.
    n = pred.size
    partials = _value_stats(pred, targ)        # (num_blocks, 8, 128)
    stats = partials[:, 0, :]                  # (num_blocks, 128)

    sum_p = jnp.sum(stats[:, S_SUM_P])
    sum_t = jnp.sum(stats[:, S_SUM_T])
    sum_pp = jnp.sum(stats[:, S_SUM_PP])
    sum_tt = jnp.sum(stats[:, S_SUM_TT])
    sum_pt = jnp.sum(stats[:, S_SUM_PT])
    sse = jnp.sum(stats[:, S_SSE])
    min_p = jnp.min(stats[:, S_MIN_P])
    min_t = jnp.min(stats[:, S_MIN_T])
    max_p = jnp.max(stats[:, S_MAX_P])
    max_t = jnp.max(stats[:, S_MAX_T])

    nf = jnp.float32(n)
    loss = sse / nf
    mean_p = sum_p / nf
    mean_t = sum_t / nf

    if pred.shape[0] > 1:
        # Pearson correlation of pred.squeeze() vs targ.squeeze()
        # (same quantity np.corrcoef(...)[0, 1] computes on host).
        cov = sum_pt / nf - mean_p * mean_t
        var_p = sum_pp / nf - mean_p * mean_p
        var_t = sum_tt / nf - mean_t * mean_t
        corr = cov * jax.lax.rsqrt(var_p * var_t)
    else:
        corr = jnp.float32(jnp.nan)

    info = {
        'mean_pred': mean_p, 'mean_targ': mean_t,
        'min_pred': min_p, 'min_targ': min_t,
        'max_pred': max_p, 'max_targ': max_t,
        'corr': corr,
    }
    return loss, info


def value_loss_ref(pred, targ):
    """Pure JAX/numpy reference mirroring the PyTorch forward (ValueL2 _loss)."""
    loss = jnp.mean((pred - targ) ** 2)
    if pred.shape[0] > 1:
        corr = np.corrcoef(np.asarray(pred).squeeze(), np.asarray(targ).squeeze())[0, 1]
    else:
        corr = np.nan
    info = {
        'mean_pred': pred.mean(), 'mean_targ': targ.mean(),
        'min_pred': pred.min(), 'min_targ': targ.min(),
        'max_pred': pred.max(), 'max_targ': targ.max(),
        'corr': corr,
    }
    return loss, info


if __name__ == "__main__":
    key = jax.random.PRNGKey(0)
    k1, k2 = jax.random.split(key)
    B = 64                                   # value predictions: (batch, 1)
    pred = jax.random.uniform(k1, (B, 1), dtype=jnp.float32)
    targ = jax.random.uniform(k2, (B, 1), dtype=jnp.float32)

    loss, info = value_loss(pred, targ)
    jax.block_until_ready((loss, info))

    loss_r, info_r = value_loss_ref(pred, targ)
    np.testing.assert_allclose(np.asarray(loss), np.asarray(loss_r),
                               rtol=1e-5, atol=1e-6)
    for k in ['mean_pred', 'mean_targ', 'min_pred', 'min_targ',
              'max_pred', 'max_targ']:
        np.testing.assert_allclose(np.asarray(info[k]), np.asarray(info_r[k]),
                                   rtol=1e-5, atol=1e-6)
    np.testing.assert_allclose(np.asarray(info['corr']), np.asarray(info_r['corr']),
                               rtol=1e-3, atol=1e-4)
    print("KERNEL_OK")
</pallas_src>

<mosaic_0001>
module attributes {stable_mosaic.version = 11 : i64} {
  func.func @kernel(%arg0: i32, %arg1: memref<8x128xf32, #tpu.memory_space<vmem>>, %arg2: memref<8x128xf32, #tpu.memory_space<vmem>>, %arg3: memref<1x8x128xf32, #tpu.memory_space<vmem>>) attributes {dimension_semantics = [#tpu.dimension_semantics<parallel>], iteration_bounds = array<i64: 1>, scalar_prefetch = 0 : i64, scratch_operands = 0 : i64, tpu.core_type = #tpu.core_type<tc>, window_params = [{transform_indices = @transform_0, window_bounds = array<i64: 8, 128>}, {transform_indices = @transform_1, window_bounds = array<i64: 8, 128>}, {transform_indices = @transform_2, window_bounds = array<i64: 1, 8, 128>}]} {
    %c0 = arith.constant 0 : index
    %c0_0 = arith.constant 0 : index
    %0 = vector.load %arg1[%c0, %c0_0] : memref<8x128xf32, #tpu.memory_space<vmem>>, vector<8x128xf32>
    %c0_1 = arith.constant 0 : index
    %c0_2 = arith.constant 0 : index
    %1 = vector.load %arg2[%c0_1, %c0_2] : memref<8x128xf32, #tpu.memory_space<vmem>>, vector<8x128xf32>
    %2 = tpu.iota {dimensions = array<i32: 0>} : vector<8x128xi32>
    %3 = tpu.iota {dimensions = array<i32: 1>} : vector<8x128xi32>
    %c8_i32 = arith.constant 8 : i32
    %4 = arith.muli %arg0, %c8_i32 : i32
    %5 = vector.broadcast %4 : i32 to vector<8x128xi32>
    %6 = arith.addi %2, %5 : vector<8x128xi32>
    %c128_i32 = arith.constant 128 : i32
    %7 = vector.broadcast %c128_i32 : i32 to vector<8x128xi32>
    %8 = arith.muli %6, %7 : vector<8x128xi32>
    %9 = arith.addi %8, %3 : vector<8x128xi32>
    %c64_i32 = arith.constant 64 : i32
    %10 = vector.broadcast %c64_i32 : i32 to vector<8x128xi32>
    %11 = arith.cmpi slt, %9, %10 : vector<8x128xi32>
    %cst = arith.constant 0.000000e+00 : f32
    %12 = vector.broadcast %cst : f32 to vector<8x128xf32>
    %13 = arith.select %11, %0, %12 : vector<8x128xi1>, vector<8x128xf32>
    %cst_3 = arith.constant 0.000000e+00 : f32
    %14 = vector.broadcast %cst_3 : f32 to vector<8x128xf32>
    %15 = arith.select %11, %1, %14 : vector<8x128xi1>, vector<8x128xf32>
    %16 = arith.subf %13, %15 : vector<8x128xf32>
    %17 = vector.shape_cast %13 : vector<8x128xf32> to vector<1x8x128xf32>
    %cst_4 = arith.constant dense<0.000000e+00> : vector<1xf32>
    %18 = vector.multi_reduction <add>, %17, %cst_4 [1, 2] : vector<1x8x128xf32> to vector<1xf32>
    %19 = vector.shape_cast %18 : vector<1xf32> to vector<1x1x1xf32>
    %20 = vector.extract %19[0, 0, 0] : f32 from vector<1x1x1xf32>
    %21 = vector.shape_cast %15 : vector<8x128xf32> to vector<1x8x128xf32>
    %cst_5 = arith.constant dense<0.000000e+00> : vector<1xf32>
    %22 = vector.multi_reduction <add>, %21, %cst_5 [1, 2] : vector<1x8x128xf32> to vector<1xf32>
    %23 = vector.shape_cast %22 : vector<1xf32> to vector<1x1x1xf32>
    %24 = vector.extract %23[0, 0, 0] : f32 from vector<1x1x1xf32>
    %25 = arith.mulf %13, %13 : vector<8x128xf32>
    %26 = vector.shape_cast %25 : vector<8x128xf32> to vector<1x8x128xf32>
    %cst_6 = arith.constant dense<0.000000e+00> : vector<1xf32>
    %27 = vector.multi_reduction <add>, %26, %cst_6 [1, 2] : vector<1x8x128xf32> to vector<1xf32>
    %28 = vector.shape_cast %27 : vector<1xf32> to vector<1x1x1xf32>
    %29 = vector.extract %28[0, 0, 0] : f32 from vector<1x1x1xf32>
    %30 = arith.mulf %15, %15 : vector<8x128xf32>
    %31 = vector.shape_cast %30 : vector<8x128xf32> to vector<1x8x128xf32>
    %cst_7 = arith.constant dense<0.000000e+00> : vector<1xf32>
    %32 = vector.multi_reduction <add>, %31, %cst_7 [1, 2] : vector<1x8x128xf32> to vector<1xf32>
    %33 = vector.shape_cast %32 : vector<1xf32> to vector<1x1x1xf32>
    %34 = vector.extract %33[0, 0, 0] : f32 from vector<1x1x1xf32>
    %35 = arith.mulf %13, %15 : vector<8x128xf32>
    %36 = vector.shape_cast %35 : vector<8x128xf32> to vector<1x8x128xf32>
    %cst_8 = arith.constant dense<0.000000e+00> : vector<1xf32>
    %37 = vector.multi_reduction <add>, %36, %cst_8 [1, 2] : vector<1x8x128xf32> to vector<1xf32>
    %38 = vector.shape_cast %37 : vector<1xf32> to vector<1x1x1xf32>
    %39 = vector.extract %38[0, 0, 0] : f32 from vector<1x1x1xf32>
    %40 = arith.mulf %16, %16 : vector<8x128xf32>
    %41 = vector.shape_cast %40 : vector<8x128xf32> to vector<1x8x128xf32>
    %cst_9 = arith.constant dense<0.000000e+00> : vector<1xf32>
    %42 = vector.multi_reduction <add>, %41, %cst_9 [1, 2] : vector<1x8x128xf32> to vector<1xf32>
    %43 = vector.shape_cast %42 : vector<1xf32> to vector<1x1x1xf32>
    %44 = vector.extract %43[0, 0, 0] : f32 from vector<1x1x1xf32>
    %cst_10 = arith.constant 0x7F800000 : f32
    %45 = vector.broadcast %cst_10 : f32 to vector<8x128xf32>
    %46 = arith.select %11, %0, %45 : vector<8x128xi1>, vector<8x128xf32>
    %47 = vector.shape_cast %46 : vector<8x128xf32> to vector<1x8x128xf32>
    %cst_11 = arith.constant dense<0x7F800000> : vector<1xf32>
    %48 = vector.multi_reduction <minimumf>, %47, %cst_11 [1, 2] : vector<1x8x128xf32> to vector<1xf32>
    %49 = vector.shape_cast %48 : vector<1xf32> to vector<1x1x1xf32>
    %50 = vector.extract %49[0, 0, 0] : f32 from vector<1x1x1xf32>
    %cst_12 = arith.constant 0x7F800000 : f32
    %51 = vector.broadcast %cst_12 : f32 to vector<8x128xf32>
    %52 = arith.select %11, %1, %51 : vector<8x128xi1>, vector<8x128xf32>
    %53 = vector.shape_cast %52 : vector<8x128xf32> to vector<1x8x128xf32>
    %cst_13 = arith.constant dense<0x7F800000> : vector<1xf32>
    %54 = vector.multi_reduction <minimumf>, %53, %cst_13 [1, 2] : vector<1x8x128xf32> to vector<1xf32>
    %55 = vector.shape_cast %54 : vector<1xf32> to vector<1x1x1xf32>
    %56 = vector.extract %55[0, 0, 0] : f32 from vector<1x1x1xf32>
    %cst_14 = arith.constant 0xFF800000 : f32
    %57 = vector.broadcast %cst_14 : f32 to vector<8x128xf32>
    %58 = arith.select %11, %0, %57 : vector<8x128xi1>, vector<8x128xf32>
    %59 = vector.shape_cast %58 : vector<8x128xf32> to vector<1x8x128xf32>
    %cst_15 = arith.constant dense<0xFF800000> : vector<1xf32>
    %60 = vector.multi_reduction <maximumf>, %59, %cst_15 [1, 2] : vector<1x8x128xf32> to vector<1xf32>
    %61 = vector.shape_cast %60 : vector<1xf32> to vector<1x1x1xf32>
    %62 = vector.extract %61[0, 0, 0] : f32 from vector<1x1x1xf32>
    %cst_16 = arith.constant 0xFF800000 : f32
    %63 = vector.broadcast %cst_16 : f32 to vector<8x128xf32>
    %64 = arith.select %11, %1, %63 : vector<8x128xi1>, vector<8x128xf32>
    %65 = vector.shape_cast %64 : vector<8x128xf32> to vector<1x8x128xf32>
    %cst_17 = arith.constant dense<0xFF800000> : vector<1xf32>
    %66 = vector.multi_reduction <maximumf>, %65, %cst_17 [1, 2] : vector<1x8x128xf32> to vector<1xf32>
    %67 = vector.shape_cast %66 : vector<1xf32> to vector<1x1x1xf32>
    %68 = vector.extract %67[0, 0, 0] : f32 from vector<1x1x1xf32>
    %69 = tpu.iota {dimensions = array<i32: 2>} : vector<1x8x128xi32>
    %cst_18 = arith.constant 0.000000e+00 : f32
    %70 = vector.broadcast %cst_18 : f32 to vector<1x8x128xf32>
    %c0_i32 = arith.constant 0 : i32
    %71 = vector.broadcast %c0_i32 : i32 to vector<1x8x128xi32>
    %72 = arith.cmpi eq, %69, %71 : vector<1x8x128xi32>
    %73 = vector.broadcast %20 : f32 to vector<1x8x128xf32>
    %74 = arith.select %72, %73, %70 : vector<1x8x128xi1>, vector<1x8x128xf32>
    %c1_i32 = arith.constant 1 : i32
    %75 = vector.broadcast %c1_i32 : i32 to vector<1x8x128xi32>
    %76 = arith.cmpi eq, %69, %75 : vector<1x8x128xi32>
    %77 = vector.broadcast %24 : f32 to vector<1x8x128xf32>
    %78 = arith.select %76, %77, %74 : vector<1x8x128xi1>, vector<1x8x128xf32>
    %c2_i32 = arith.constant 2 : i32
    %79 = vector.broadcast %c2_i32 : i32 to vector<1x8x128xi32>
    %80 = arith.cmpi eq, %69, %79 : vector<1x8x128xi32>
    %81 = vector.broadcast %29 : f32 to vector<1x8x128xf32>
    %82 = arith.select %80, %81, %78 : vector<1x8x128xi1>, vector<1x8x128xf32>
    %c3_i32 = arith.constant 3 : i32
    %83 = vector.broadcast %c3_i32 : i32 to vector<1x8x128xi32>
    %84 = arith.cmpi eq, %69, %83 : vector<1x8x128xi32>
    %85 = vector.broadcast %34 : f32 to vector<1x8x128xf32>
    %86 = arith.select %84, %85, %82 : vector<1x8x128xi1>, vector<1x8x128xf32>
    %c4_i32 = arith.constant 4 : i32
    %87 = vector.broadcast %c4_i32 : i32 to vector<1x8x128xi32>
    %88 = arith.cmpi eq, %69, %87 : vector<1x8x128xi32>
    %89 = vector.broadcast %39 : f32 to vector<1x8x128xf32>
    %90 = arith.select %88, %89, %86 : vector<1x8x128xi1>, vector<1x8x128xf32>
    %c5_i32 = arith.constant 5 : i32
    %91 = vector.broadcast %c5_i32 : i32 to vector<1x8x128xi32>
    %92 = arith.cmpi eq, %69, %91 : vector<1x8x128xi32>
    %93 = vector.broadcast %44 : f32 to vector<1x8x128xf32>
    %94 = arith.select %92, %93, %90 : vector<1x8x128xi1>, vector<1x8x128xf32>
    %c6_i32 = arith.constant 6 : i32
    %95 = vector.broadcast %c6_i32 : i32 to vector<1x8x128xi32>
    %96 = arith.cmpi eq, %69, %95 : vector<1x8x128xi32>
    %97 = vector.broadcast %50 : f32 to vector<1x8x128xf32>
    %98 = arith.select %96, %97, %94 : vector<1x8x128xi1>, vector<1x8x128xf32>
    %c7_i32 = arith.constant 7 : i32
    %99 = vector.broadcast %c7_i32 : i32 to vector<1x8x128xi32>
    %100 = arith.cmpi eq, %69, %99 : vector<1x8x128xi32>
    %101 = vector.broadcast %56 : f32 to vector<1x8x128xf32>
    %102 = arith.select %100, %101, %98 : vector<1x8x128xi1>, vector<1x8x128xf32>
    %c8_i32_19 = arith.constant 8 : i32
    %103 = vector.broadcast %c8_i32_19 : i32 to vector<1x8x128xi32>
    %104 = arith.cmpi eq, %69, %103 : vector<1x8x128xi32>
    %105 = vector.broadcast %62 : f32 to vector<1x8x128xf32>
    %106 = arith.select %104, %105, %102 : vector<1x8x128xi1>, vector<1x8x128xf32>
    %c9_i32 = arith.constant 9 : i32
    %107 = vector.broadcast %c9_i32 : i32 to vector<1x8x128xi32>
    %108 = arith.cmpi eq, %69, %107 : vector<1x8x128xi32>
    %109 = vector.broadcast %68 : f32 to vector<1x8x128xf32>
    %110 = arith.select %108, %109, %106 : vector<1x8x128xi1>, vector<1x8x128xf32>
    %c0_20 = arith.constant 0 : index
    %c0_21 = arith.constant 0 : index
    %c0_22 = arith.constant 0 : index
    %111 = vector.load %arg3[%c0_20, %c0_21, %c0_22] : memref<1x8x128xf32, #tpu.memory_space<vmem>>, vector<1x8x128xf32>
    tpu.vector_store %arg3[%c0_20, %c0_21, %c0_22], %110 {strides = array<i32>} : memref<1x8x128xf32, #tpu.memory_space<vmem>>, vector<1x8x128xf32>,
    return
  }
  func.func @transform_0(%arg0: i32) -> (i32, i32) {
    %c0_i32 = arith.constant 0 : i32
    %c0_i32_0 = arith.constant 0 : i32
    return %arg0, %c0_i32 : i32, i32
  }
  func.func @transform_1(%arg0: i32) -> (i32, i32) {
    %c0_i32 = arith.constant 0 : i32
    %c0_i32_0 = arith.constant 0 : i32
    return %arg0, %c0_i32 : i32, i32
  }
  func.func @transform_2(%arg0: i32) -> (i32, i32, i32) {
    %c0_i32 = arith.constant 0 : i32
    %c0_i32_0 = arith.constant 0 : i32
    %c0_i32_1 = arith.constant 0 : i32
    return %arg0, %c0_i32, %c0_i32_0 : i32, i32, i32
  }
}

</mosaic_0001>

<llo_original>
// kernel: tpu_custom_call.1
$region0: #{tpu_custom_call.1}
  #allocation0 [shape = 'u32[]', space=smem, size = 0x4, offset = 0x4, fixed_abs, tag = 'smem constant byte address 0x4 - core index']
  #allocation1 [shape = 'u32[144,128]{1,0:T(1,128)}', space=vmem, size = 0x12000, scoped, tag = 'internal scratch']
  %s0 = inlined_call_operand.hbm [shape: f32[8,128], index: 0, kind: input, shape index: {}]
  %s1 = inlined_call_operand.hbm [shape: f32[8,128], index: 1, kind: input, shape index: {}]
  %s2 = inlined_call_operand.hbm [shape: f32[1,8,128], index: 2, kind: output, shape index: {}]
  %s3 = sld [smem:[#allocation0]]
  $region26: #{tpu_custom_call.1} parent=0
    _
  %s5 = ssub.s32 1, %s3
  %s6 = scalar_select 0, %s5, %s3
  $region1: #{tpu_custom_call.1} parent=0
    #allocation2 [shape = 'u8[4096]{0}', space=vmem, size = 0x1000, scoped, tag = 'input window, operand 0, single buffered']
    #allocation3 [shape = 's32[1]{0}', space=sflag, size = 0x4, scoped, tag = 'scoped memory for tpu_custom_call.1']
    #allocation4 [shape = 's32[1]{0}', space=sflag, size = 0x4, scoped, tag = 'scoped memory for tpu_custom_call.1']
    #allocation5 [shape = 'u8[4096]{0}', space=vmem, size = 0x1000, scoped, tag = 'input window, operand 1, single buffered']
    #allocation6 [shape = 's32[1]{0}', space=sflag, size = 0x4, scoped, tag = 'scoped memory for tpu_custom_call.1']
    #allocation7 [shape = 'u8[4096]{0}', space=vmem, size = 0x1000, scoped, tag = 'output window, operand 0, single buffered']
    %7 = vsyncpa [#allocation3], 0
    %8 = vsyncpa [#allocation6], 0
    %9 = vsyncpa [#allocation4], 0
    // Predicated region
    $region2: #{tpu_custom_call.1} parent=1 // pred_check
      _
    $region3: #{tpu_custom_call.1} parent=1 // pred_check_branch
      %11 = sbr.rel (0) target = $region5
    $region4: #{tpu_custom_call.1} parent=1 // pred_region
      %s13 = ssub.s32 128, 128
      %14 = vsyncadd [#allocation3], %s13
      %s16 = sshll.u32 [#allocation2], 4
      %s17 = int_to_ptr.vmem [resolvable:$true] %s16
      %19 = dma.hbm_to_vmem [thread:$0]  %s0, 128, %s17, [#allocation3]
    $region5: #{tpu_custom_call.1} parent=1 // pred_fallthru
      _
    // Predicated region
    $region6: #{tpu_custom_call.1} parent=1 // pred_check
      _
    $region7: #{tpu_custom_call.1} parent=1 // pred_check_branch
      %21 = sbr.rel (0) target = $region9
    $region8: #{tpu_custom_call.1} parent=1 // pred_region
      %s23 = ssub.s32 128, 128
      %24 = vsyncadd [#allocation6], %s23
      %s26 = sshll.u32 [#allocation5], 4
      %s27 = int_to_ptr.vmem [resolvable:$true] %s26
      %29 = dma.hbm_to_vmem [thread:$0]  %s1, 128, %s27, [#allocation6]
    $region9: #{tpu_custom_call.1} parent=1 // pred_fallthru
      _
    // Predicated region
    $region10: #{tpu_custom_call.1} parent=1 // pred_check
      _
    $region11: #{tpu_custom_call.1} parent=1 // pred_check_branch
      %31 = sbr.rel (0) target = $region13
    $region12: #{tpu_custom_call.1} parent=1 // pred_region
      %32 = dma.done [#allocation3], 128
    $region13: #{tpu_custom_call.1} parent=1 // pred_fallthru
      _
    // Predicated region
    $region14: #{tpu_custom_call.1} parent=1 // pred_check
      _
    $region15: #{tpu_custom_call.1} parent=1 // pred_check_branch
      %34 = sbr.rel (0) target = $region17
    $region16: #{tpu_custom_call.1} parent=1 // pred_region
      %35 = dma.done [#allocation6], 128
    $region17: #{tpu_custom_call.1} parent=1 // pred_fallthru
      _
    %v36 = vld [vmem:[#allocation2] sm:$0xff]
    %v37 = vld [vmem:[#allocation5] sm:$0xff]
    %v38 = vlaneseq
    %v39 = vshrl.u32 %v38, 7
    %v40 = vlaneseq
    %v41 = vand.u32 %v40, 127
    %s42 = smul.u32 0, 8
    %v43 = vstv %s42
    %v44 = vadd.s32 %v39, %v43
    %v45 = vmul.u32 %v44, 128
    %v46 = vadd.s32 %v45, %v41
    %vm47 = vcmp.lt.s32.totalorder %v46, 64
    %v48 = vsel %vm47, %v36, 0.0
    %v49 = vsel %vm47, %v37, 0.0
    %v50 = vsub.f32 %v48, %v49
    %51 = vadd.xlane.f32.xlu0 %v48
    %v52 = vpop.xlane.xlu0 %51
    %v53 = vrot.slane %v52, 4
    %v54 = vadd.f32 %v52, %v53
    %v55 = vrot.slane %v54, 2
    %v56 = vadd.f32 %v54, %v55
    %v57 = vrot.slane %v56, 1
    %v58 = vadd.f32 %v56, %v57
    %s59 = vtos %v58
    %60 = vadd.xlane.f32.xlu0 %v49
    %v61 = vpop.xlane.xlu0 %60
    %v62 = vrot.slane %v61, 4
    %v63 = vadd.f32 %v61, %v62
    %v64 = vrot.slane %v63, 2
    %v65 = vadd.f32 %v63, %v64
    %v66 = vrot.slane %v65, 1
    %v67 = vadd.f32 %v65, %v66
    %s68 = vtos %v67
    %v69 = vmul.f32 %v48, %v48
    %70 = vadd.xlane.f32.xlu0 %v69
    %v71 = vpop.xlane.xlu0 %70
    %v72 = vrot.slane %v71, 4
    %v73 = vadd.f32 %v71, %v72
    %v74 = vrot.slane %v73, 2
    %v75 = vadd.f32 %v73, %v74
    %v76 = vrot.slane %v75, 1
    %v77 = vadd.f32 %v75, %v76
    %s78 = vtos %v77
    %v79 = vmul.f32 %v49, %v49
    %80 = vadd.xlane.f32.xlu0 %v79
    %v81 = vpop.xlane.xlu0 %80
    %v82 = vrot.slane %v81, 4
    %v83 = vadd.f32 %v81, %v82
    %v84 = vrot.slane %v83, 2
    %v85 = vadd.f32 %v83, %v84
    %v86 = vrot.slane %v85, 1
    %v87 = vadd.f32 %v85, %v86
    %s88 = vtos %v87
    %v89 = vmul.f32 %v48, %v49
    %90 = vadd.xlane.f32.xlu0 %v89
    %v91 = vpop.xlane.xlu0 %90
    %v92 = vrot.slane %v91, 4
    %v93 = vadd.f32 %v91, %v92
    %v94 = vrot.slane %v93, 2
    %v95 = vadd.f32 %v93, %v94
    %v96 = vrot.slane %v95, 1
    %v97 = vadd.f32 %v95, %v96
    %s98 = vtos %v97
    %v99 = vmul.f32 %v50, %v50
    %100 = vadd.xlane.f32.xlu0 %v99
    %v101 = vpop.xlane.xlu0 %100
    %v102 = vrot.slane %v101, 4
    %v103 = vadd.f32 %v101, %v102
    %v104 = vrot.slane %v103, 2
    %v105 = vadd.f32 %v103, %v104
    %v106 = vrot.slane %v105, 1
    %v107 = vadd.f32 %v105, %v106
    %s108 = vtos %v107
    %v109 = vsel %vm47, %v36, inf
    %110 = vmin.xlane.f32.xlu0 %v109
    %v111 = vpop.xlane.xlu0 %110
    %v112 = vrot.slane %v111, 4
    %v113 = vmin.f32 %v111, %v112
    %v114 = vrot.slane %v113, 2
    %v115 = vmin.f32 %v113, %v114
    %v116 = vrot.slane %v115, 1
    %v117 = vmin.f32 %v115, %v116
    %s118 = vtos %v117
    %v119 = vsel %vm47, %v37, inf
    %120 = vmin.xlane.f32.xlu0 %v119
    %v121 = vpop.xlane.xlu0 %120
    %v122 = vrot.slane %v121, 4
    %v123 = vmin.f32 %v121, %v122
    %v124 = vrot.slane %v123, 2
    %v125 = vmin.f32 %v123, %v124
    %v126 = vrot.slane %v125, 1
    %v127 = vmin.f32 %v125, %v126
    %s128 = vtos %v127
    %v129 = vsel %vm47, %v36, -inf
    %130 = vmax.xlane.f32.xlu0 %v129
    %v131 = vpop.xlane.xlu0 %130
    %v132 = vrot.slane %v131, 4
    %v133 = vmax.f32 %v131, %v132
    %v134 = vrot.slane %v133, 2
    %v135 = vmax.f32 %v133, %v134
    %v136 = vrot.slane %v135, 1
    %v137 = vmax.f32 %v135, %v136
    %s138 = vtos %v137
    %v139 = vsel %vm47, %v37, -inf
    %140 = vmax.xlane.f32.xlu0 %v139
    %v141 = vpop.xlane.xlu0 %140
    %v142 = vrot.slane %v141, 4
    %v143 = vmax.f32 %v141, %v142
    %v144 = vrot.slane %v143, 2
    %v145 = vmax.f32 %v143, %v144
    %v146 = vrot.slane %v145, 1
    %v147 = vmax.f32 %v145, %v146
    %s148 = vtos %v147
    %vm149 = vcmp.eq.s32.totalorder %v41, 0
    %v150 = vstv %s59
    %v151 = vsel %vm149, %v150, 0.0
    %vm152 = vcmp.eq.s32.totalorder %v41, 1
    %v153 = vstv %s68
    %v154 = vsel %vm152, %v153, %v151
    %vm155 = vcmp.eq.s32.totalorder %v41, 2
    %v156 = vstv %s78
    %v157 = vsel %vm155, %v156, %v154
    %vm158 = vcmp.eq.s32.totalorder %v41, 3
    %v159 = vstv %s88
    %v160 = vsel %vm158, %v159, %v157
    %vm161 = vcmp.eq.s32.totalorder %v41, 4
    %v162 = vstv %s98
    %v163 = vsel %vm161, %v162, %v160
    %vm164 = vcmp.eq.s32.totalorder %v41, 5
    %v165 = vstv %s108
    %v166 = vsel %vm164, %v165, %v163
    %vm167 = vcmp.eq.s32.totalorder %v41, 6
    %v168 = vstv %s118
    %v169 = vsel %vm167, %v168, %v166
    %vm170 = vcmp.eq.s32.totalorder %v41, 7
    %v171 = vstv %s128
    %v172 = vsel %vm170, %v171, %v169
    %vm173 = vcmp.eq.s32.totalorder %v41, 8
    %v174 = vstv %s138
    %v175 = vsel %vm173, %v174, %v172
    %vm176 = vcmp.eq.s32.totalorder %v41, 9
    %v177 = vstv %s148
    %v178 = vsel %vm176, %v177, %v175
    %179 = vst [vmem:[#allocation7] sm:$0xff] %v178
    // Predicated region
    $region18: #{tpu_custom_call.1} parent=1 // pred_check
      _
    $region19: #{tpu_custom_call.1} parent=1 // pred_check_branch
      %181 = sbr.rel (0) target = $region21
    $region20: #{tpu_custom_call.1} parent=1 // pred_region
      %s183 = ssub.s32 128, 128
      %184 = vsyncadd [#allocation4], %s183
      %s186 = sshll.u32 [#allocation7], 4
      %s187 = int_to_ptr.vmem [resolvable:$true] %s186
      %189 = dma.vmem_to_hbm [thread:$0]  %s187, 128, %s2, [#allocation4]
    $region21: #{tpu_custom_call.1} parent=1 // pred_fallthru
      _
    // Predicated region
    $region22: #{tpu_custom_call.1} parent=1 // pred_check
      _
    $region23: #{tpu_custom_call.1} parent=1 // pred_check_branch
      %191 = sbr.rel (0) target = $region25
    $region24: #{tpu_custom_call.1} parent=1 // pred_region
      %192 = dma.done [#allocation4], 128
    $region25: #{tpu_custom_call.1} parent=1 // pred_fallthru
      _
    %193 = vsyncpa [#allocation3], 1
    %194 = vsyncpa [#allocation6], 1
    %195 = vsyncpa [#allocation4], 1

</llo_original>
